<compile_context>
chip_gen: v7x
topology: tpu7x:2x2x1
jax: 0.10.0
libtpu: 0.0.40
codegen_flags: <defaults>
</compile_context>

<pallas_src>
import math
import jax
import jax.numpy as jnp
from jax.experimental import pallas as pl
from jax.experimental.pallas import tpu as pltpu

HIDDEN = 16
SUBLANE = 8
LANE = 128
MAX_BR = 256      # block rows  -> (256, 1024) f32 block = 1 MiB
MAX_BC = 1024     # block lanes


def controller_kernel(p_ref, x_ref, o_ref):
    """o = 1 + tanh( b2/2 + sum_j relu(x*w1_j + b1_j) * (w2_j/2) )  ==  2*sigmoid(net_range(x))

    p_ref : (3*HIDDEN+1,) f32 in SMEM: [w1(16) | b1(16) | w2/2(16) | b2/2(1)]
    x_ref : (BR, BC) f32 sublane+lane dense block of scalar inputs
    o_ref : (BR, BC) f32
    """
    x = x_ref[...]
    acc = jnp.full(x.shape, p_ref[3 * HIDDEN], dtype=jnp.float32)     # start from b2/2
    for j in range(HIDDEN):                                           # unrolled hidden loop
        acc = acc + jnp.maximum(x * p_ref[j] + p_ref[HIDDEN + j], 0.0) * p_ref[2 * HIDDEN + j]
    # 2*sigmoid(z) == 1 + tanh(z/2); tanh issues on the otherwise-idle EUP slot.
    o_ref[...] = (1.0 + jnp.tanh(acc)).astype(o_ref.dtype)


def pack_params(w1, b1, w2, b2):
    """Pack the 49 net_range params into one flat (49,) f32 SMEM table.

    w2/b2 are pre-scaled by 0.5 so the kernel epilogue is just 1 + tanh(acc)."""
    return jnp.concatenate([
        w1.reshape(HIDDEN).astype(jnp.float32),
        b1.reshape(HIDDEN).astype(jnp.float32),
        0.5 * w2.reshape(HIDDEN).astype(jnp.float32),
        0.5 * b2.reshape(1).astype(jnp.float32),
    ])


def _slab_geometry(n):
    """Lay N scalar inputs out as a (rows_pad, bc) slab tiled in (br, bc) blocks."""
    bc = min(MAX_BC, LANE * max(1, pl.cdiv(n, LANE)))          # lanes, multiple of 128
    rows = pl.cdiv(n, bc)
    rows_pad = SUBLANE * pl.cdiv(rows, SUBLANE)                # sublanes, multiple of 8
    br = min(MAX_BR, rows_pad)
    if rows_pad >= 2 * SUBLANE:
        # keep >= 2 grid blocks so the "parallel" axis can span both v7x TensorCores
        br = min(br, max(SUBLANE, SUBLANE * ((rows_pad // 2) // SUBLANE)))
    rows_pad = br * pl.cdiv(rows_pad, br)                      # grid divides exactly
    return rows_pad, bc, br


def controller_range_sigmoid(x, params_flat):
    """x: (N, 1) f32. Returns (N, 1) f32 == 2 * sigmoid(net_range(x))."""
    n = x.shape[0]
    rows_pad, bc, br = _slab_geometry(n)

    x_flat = x.reshape(-1).astype(jnp.float32)
    total = rows_pad * bc
    if total != n:
        # TODO(synk): for very large N a masked ragged tail would avoid this pad copy;
        # the pad here is at most ~one block and negligible at the demo shape.
        x_flat = jnp.pad(x_flat, (0, total - n))
    x_slab = x_flat.reshape(rows_pad, bc)

    out_slab = pl.pallas_call(
        controller_kernel,
        out_shape=jax.ShapeDtypeStruct((rows_pad, bc), jnp.float32),
        grid=(rows_pad // br,),
        in_specs=[
            pl.BlockSpec(memory_space=pltpu.MemorySpace.SMEM),   # 49 params, scalar reads
            pl.BlockSpec((br, bc), lambda i: (i, 0)),            # x block (sublane+lane dense)
        ],
        out_specs=pl.BlockSpec((br, bc), lambda i: (i, 0)),
        compiler_params=pltpu.CompilerParams(
            dimension_semantics=("parallel",)),
    )(params_flat, x_slab)

    # padded tail lanes hold garbage activations; slice them off before returning
    return out_slab.reshape(-1)[:n].reshape(n, 1)


def init_params(key):
    """Deterministic init mimicking nn.Linear default (U[-1/sqrt(fan_in), 1/sqrt(fan_in)]).
    Weights are stored transposed: (in_features, out_features)."""
    k1, k2, k3, k4 = jax.random.split(key, 4)
    bound1 = 1.0 / math.sqrt(1.0)      # fan_in = 1
    bound2 = 1.0 / math.sqrt(HIDDEN)   # fan_in = 16
    w1 = jax.random.uniform(k1, (1, HIDDEN), jnp.float32, -bound1, bound1)
    b1 = jax.random.uniform(k2, (1, HIDDEN), jnp.float32, -bound1, bound1)
    w2 = jax.random.uniform(k3, (HIDDEN, 1), jnp.float32, -bound2, bound2)
    b2 = jax.random.uniform(k4, (1, 1), jnp.float32, -bound2, bound2)
    return w1, b1, w2, b2


def reference(x, w1, b1, w2, b2):
    h = jnp.maximum(x @ w1 + b1, 0.0)
    return 2.0 * jax.nn.sigmoid(h @ w2 + b2)


if __name__ == "__main__":
    key = jax.random.PRNGKey(0)
    kx, kp = jax.random.split(key)

    # small batch of scalar inputs, matching nn.Linear(1, 16): x is (N, 1)
    x = jax.random.normal(kx, (8, 1), jnp.float32)

    # params for self.net_range (the only branch that affects the output).
    # TODO(synk): self.net / y_soft / y_hard branch is dead code in the PyTorch forward
    # (its result never reaches the return value), so it is not computed here.
    w1, b1, w2, b2 = init_params(kp)
    params_flat = pack_params(w1, b1, w2, b2)

    out = controller_range_sigmoid(x, params_flat)
    out = jax.block_until_ready(out)

    ref = reference(x, w1, b1, w2, b2)
    assert out.shape == (8, 1)
    assert jnp.allclose(out, ref, atol=1e-4, rtol=1e-4)

    print("KERNEL_OK")
</pallas_src>

<mosaic_0001>
module attributes {stable_mosaic.version = 11 : i64} {
  func.func @controller_kernel(%arg0: i32, %arg1: memref<49xf32, #tpu.memory_space<smem>>, %arg2: memref<8x128xf32, #tpu.memory_space<vmem>>, %arg3: memref<8x128xf32, #tpu.memory_space<vmem>>) attributes {dimension_semantics = [#tpu.dimension_semantics<parallel>], iteration_bounds = array<i64: 1>, scalar_prefetch = 0 : i64, scratch_operands = 0 : i64, tpu.core_type = #tpu.core_type<tc>, window_params = [{transform_indices = @transform_0, window_bounds = array<i64: 49>}, {transform_indices = @transform_1, window_bounds = array<i64: 8, 128>}, {transform_indices = @transform_2, window_bounds = array<i64: 8, 128>}]} {
    %c0 = arith.constant 0 : index
    %c0_0 = arith.constant 0 : index
    %0 = vector.load %arg2[%c0, %c0_0] : memref<8x128xf32, #tpu.memory_space<vmem>>, vector<8x128xf32>
    %c48 = arith.constant 48 : index
    %1 = memref.load %arg1[%c48] : memref<49xf32, #tpu.memory_space<smem>>
    %2 = vector.broadcast %1 : f32 to vector<8x128xf32>
    %c0_1 = arith.constant 0 : index
    %3 = memref.load %arg1[%c0_1] : memref<49xf32, #tpu.memory_space<smem>>
    %4 = vector.broadcast %3 : f32 to vector<8x128xf32>
    %5 = arith.mulf %0, %4 : vector<8x128xf32>
    %c16 = arith.constant 16 : index
    %6 = memref.load %arg1[%c16] : memref<49xf32, #tpu.memory_space<smem>>
    %7 = vector.broadcast %6 : f32 to vector<8x128xf32>
    %8 = arith.addf %5, %7 : vector<8x128xf32>
    %cst = arith.constant 0.000000e+00 : f32
    %9 = vector.broadcast %cst : f32 to vector<8x128xf32>
    %10 = arith.maximumf %8, %9 : vector<8x128xf32>
    %c32 = arith.constant 32 : index
    %11 = memref.load %arg1[%c32] : memref<49xf32, #tpu.memory_space<smem>>
    %12 = vector.broadcast %11 : f32 to vector<8x128xf32>
    %13 = arith.mulf %10, %12 : vector<8x128xf32>
    %14 = arith.addf %2, %13 : vector<8x128xf32>
    %c1 = arith.constant 1 : index
    %15 = memref.load %arg1[%c1] : memref<49xf32, #tpu.memory_space<smem>>
    %16 = vector.broadcast %15 : f32 to vector<8x128xf32>
    %17 = arith.mulf %0, %16 : vector<8x128xf32>
    %c17 = arith.constant 17 : index
    %18 = memref.load %arg1[%c17] : memref<49xf32, #tpu.memory_space<smem>>
    %19 = vector.broadcast %18 : f32 to vector<8x128xf32>
    %20 = arith.addf %17, %19 : vector<8x128xf32>
    %cst_2 = arith.constant 0.000000e+00 : f32
    %21 = vector.broadcast %cst_2 : f32 to vector<8x128xf32>
    %22 = arith.maximumf %20, %21 : vector<8x128xf32>
    %c33 = arith.constant 33 : index
    %23 = memref.load %arg1[%c33] : memref<49xf32, #tpu.memory_space<smem>>
    %24 = vector.broadcast %23 : f32 to vector<8x128xf32>
    %25 = arith.mulf %22, %24 : vector<8x128xf32>
    %26 = arith.addf %14, %25 : vector<8x128xf32>
    %c2 = arith.constant 2 : index
    %27 = memref.load %arg1[%c2] : memref<49xf32, #tpu.memory_space<smem>>
    %28 = vector.broadcast %27 : f32 to vector<8x128xf32>
    %29 = arith.mulf %0, %28 : vector<8x128xf32>
    %c18 = arith.constant 18 : index
    %30 = memref.load %arg1[%c18] : memref<49xf32, #tpu.memory_space<smem>>
    %31 = vector.broadcast %30 : f32 to vector<8x128xf32>
    %32 = arith.addf %29, %31 : vector<8x128xf32>
    %cst_3 = arith.constant 0.000000e+00 : f32
    %33 = vector.broadcast %cst_3 : f32 to vector<8x128xf32>
    %34 = arith.maximumf %32, %33 : vector<8x128xf32>
    %c34 = arith.constant 34 : index
    %35 = memref.load %arg1[%c34] : memref<49xf32, #tpu.memory_space<smem>>
    %36 = vector.broadcast %35 : f32 to vector<8x128xf32>
    %37 = arith.mulf %34, %36 : vector<8x128xf32>
    %38 = arith.addf %26, %37 : vector<8x128xf32>
    %c3 = arith.constant 3 : index
    %39 = memref.load %arg1[%c3] : memref<49xf32, #tpu.memory_space<smem>>
    %40 = vector.broadcast %39 : f32 to vector<8x128xf32>
    %41 = arith.mulf %0, %40 : vector<8x128xf32>
    %c19 = arith.constant 19 : index
    %42 = memref.load %arg1[%c19] : memref<49xf32, #tpu.memory_space<smem>>
    %43 = vector.broadcast %42 : f32 to vector<8x128xf32>
    %44 = arith.addf %41, %43 : vector<8x128xf32>
    %cst_4 = arith.constant 0.000000e+00 : f32
    %45 = vector.broadcast %cst_4 : f32 to vector<8x128xf32>
    %46 = arith.maximumf %44, %45 : vector<8x128xf32>
    %c35 = arith.constant 35 : index
    %47 = memref.load %arg1[%c35] : memref<49xf32, #tpu.memory_space<smem>>
    %48 = vector.broadcast %47 : f32 to vector<8x128xf32>
    %49 = arith.mulf %46, %48 : vector<8x128xf32>
    %50 = arith.addf %38, %49 : vector<8x128xf32>
    %c4 = arith.constant 4 : index
    %51 = memref.load %arg1[%c4] : memref<49xf32, #tpu.memory_space<smem>>
    %52 = vector.broadcast %51 : f32 to vector<8x128xf32>
    %53 = arith.mulf %0, %52 : vector<8x128xf32>
    %c20 = arith.constant 20 : index
    %54 = memref.load %arg1[%c20] : memref<49xf32, #tpu.memory_space<smem>>
    %55 = vector.broadcast %54 : f32 to vector<8x128xf32>
    %56 = arith.addf %53, %55 : vector<8x128xf32>
    %cst_5 = arith.constant 0.000000e+00 : f32
    %57 = vector.broadcast %cst_5 : f32 to vector<8x128xf32>
    %58 = arith.maximumf %56, %57 : vector<8x128xf32>
    %c36 = arith.constant 36 : index
    %59 = memref.load %arg1[%c36] : memref<49xf32, #tpu.memory_space<smem>>
    %60 = vector.broadcast %59 : f32 to vector<8x128xf32>
    %61 = arith.mulf %58, %60 : vector<8x128xf32>
    %62 = arith.addf %50, %61 : vector<8x128xf32>
    %c5 = arith.constant 5 : index
    %63 = memref.load %arg1[%c5] : memref<49xf32, #tpu.memory_space<smem>>
    %64 = vector.broadcast %63 : f32 to vector<8x128xf32>
    %65 = arith.mulf %0, %64 : vector<8x128xf32>
    %c21 = arith.constant 21 : index
    %66 = memref.load %arg1[%c21] : memref<49xf32, #tpu.memory_space<smem>>
    %67 = vector.broadcast %66 : f32 to vector<8x128xf32>
    %68 = arith.addf %65, %67 : vector<8x128xf32>
    %cst_6 = arith.constant 0.000000e+00 : f32
    %69 = vector.broadcast %cst_6 : f32 to vector<8x128xf32>
    %70 = arith.maximumf %68, %69 : vector<8x128xf32>
    %c37 = arith.constant 37 : index
    %71 = memref.load %arg1[%c37] : memref<49xf32, #tpu.memory_space<smem>>
    %72 = vector.broadcast %71 : f32 to vector<8x128xf32>
    %73 = arith.mulf %70, %72 : vector<8x128xf32>
    %74 = arith.addf %62, %73 : vector<8x128xf32>
    %c6 = arith.constant 6 : index
    %75 = memref.load %arg1[%c6] : memref<49xf32, #tpu.memory_space<smem>>
    %76 = vector.broadcast %75 : f32 to vector<8x128xf32>
    %77 = arith.mulf %0, %76 : vector<8x128xf32>
    %c22 = arith.constant 22 : index
    %78 = memref.load %arg1[%c22] : memref<49xf32, #tpu.memory_space<smem>>
    %79 = vector.broadcast %78 : f32 to vector<8x128xf32>
    %80 = arith.addf %77, %79 : vector<8x128xf32>
    %cst_7 = arith.constant 0.000000e+00 : f32
    %81 = vector.broadcast %cst_7 : f32 to vector<8x128xf32>
    %82 = arith.maximumf %80, %81 : vector<8x128xf32>
    %c38 = arith.constant 38 : index
    %83 = memref.load %arg1[%c38] : memref<49xf32, #tpu.memory_space<smem>>
    %84 = vector.broadcast %83 : f32 to vector<8x128xf32>
    %85 = arith.mulf %82, %84 : vector<8x128xf32>
    %86 = arith.addf %74, %85 : vector<8x128xf32>
    %c7 = arith.constant 7 : index
    %87 = memref.load %arg1[%c7] : memref<49xf32, #tpu.memory_space<smem>>
    %88 = vector.broadcast %87 : f32 to vector<8x128xf32>
    %89 = arith.mulf %0, %88 : vector<8x128xf32>
    %c23 = arith.constant 23 : index
    %90 = memref.load %arg1[%c23] : memref<49xf32, #tpu.memory_space<smem>>
    %91 = vector.broadcast %90 : f32 to vector<8x128xf32>
    %92 = arith.addf %89, %91 : vector<8x128xf32>
    %cst_8 = arith.constant 0.000000e+00 : f32
    %93 = vector.broadcast %cst_8 : f32 to vector<8x128xf32>
    %94 = arith.maximumf %92, %93 : vector<8x128xf32>
    %c39 = arith.constant 39 : index
    %95 = memref.load %arg1[%c39] : memref<49xf32, #tpu.memory_space<smem>>
    %96 = vector.broadcast %95 : f32 to vector<8x128xf32>
    %97 = arith.mulf %94, %96 : vector<8x128xf32>
    %98 = arith.addf %86, %97 : vector<8x128xf32>
    %c8 = arith.constant 8 : index
    %99 = memref.load %arg1[%c8] : memref<49xf32, #tpu.memory_space<smem>>
    %100 = vector.broadcast %99 : f32 to vector<8x128xf32>
    %101 = arith.mulf %0, %100 : vector<8x128xf32>
    %c24 = arith.constant 24 : index
    %102 = memref.load %arg1[%c24] : memref<49xf32, #tpu.memory_space<smem>>
    %103 = vector.broadcast %102 : f32 to vector<8x128xf32>
    %104 = arith.addf %101, %103 : vector<8x128xf32>
    %cst_9 = arith.constant 0.000000e+00 : f32
    %105 = vector.broadcast %cst_9 : f32 to vector<8x128xf32>
    %106 = arith.maximumf %104, %105 : vector<8x128xf32>
    %c40 = arith.constant 40 : index
    %107 = memref.load %arg1[%c40] : memref<49xf32, #tpu.memory_space<smem>>
    %108 = vector.broadcast %107 : f32 to vector<8x128xf32>
    %109 = arith.mulf %106, %108 : vector<8x128xf32>
    %110 = arith.addf %98, %109 : vector<8x128xf32>
    %c9 = arith.constant 9 : index
    %111 = memref.load %arg1[%c9] : memref<49xf32, #tpu.memory_space<smem>>
    %112 = vector.broadcast %111 : f32 to vector<8x128xf32>
    %113 = arith.mulf %0, %112 : vector<8x128xf32>
    %c25 = arith.constant 25 : index
    %114 = memref.load %arg1[%c25] : memref<49xf32, #tpu.memory_space<smem>>
    %115 = vector.broadcast %114 : f32 to vector<8x128xf32>
    %116 = arith.addf %113, %115 : vector<8x128xf32>
    %cst_10 = arith.constant 0.000000e+00 : f32
    %117 = vector.broadcast %cst_10 : f32 to vector<8x128xf32>
    %118 = arith.maximumf %116, %117 : vector<8x128xf32>
    %c41 = arith.constant 41 : index
    %119 = memref.load %arg1[%c41] : memref<49xf32, #tpu.memory_space<smem>>
    %120 = vector.broadcast %119 : f32 to vector<8x128xf32>
    %121 = arith.mulf %118, %120 : vector<8x128xf32>
    %122 = arith.addf %110, %121 : vector<8x128xf32>
    %c10 = arith.constant 10 : index
    %123 = memref.load %arg1[%c10] : memref<49xf32, #tpu.memory_space<smem>>
    %124 = vector.broadcast %123 : f32 to vector<8x128xf32>
    %125 = arith.mulf %0, %124 : vector<8x128xf32>
    %c26 = arith.constant 26 : index
    %126 = memref.load %arg1[%c26] : memref<49xf32, #tpu.memory_space<smem>>
    %127 = vector.broadcast %126 : f32 to vector<8x128xf32>
    %128 = arith.addf %125, %127 : vector<8x128xf32>
    %cst_11 = arith.constant 0.000000e+00 : f32
    %129 = vector.broadcast %cst_11 : f32 to vector<8x128xf32>
    %130 = arith.maximumf %128, %129 : vector<8x128xf32>
    %c42 = arith.constant 42 : index
    %131 = memref.load %arg1[%c42] : memref<49xf32, #tpu.memory_space<smem>>
    %132 = vector.broadcast %131 : f32 to vector<8x128xf32>
    %133 = arith.mulf %130, %132 : vector<8x128xf32>
    %134 = arith.addf %122, %133 : vector<8x128xf32>
    %c11 = arith.constant 11 : index
    %135 = memref.load %arg1[%c11] : memref<49xf32, #tpu.memory_space<smem>>
    %136 = vector.broadcast %135 : f32 to vector<8x128xf32>
    %137 = arith.mulf %0, %136 : vector<8x128xf32>
    %c27 = arith.constant 27 : index
    %138 = memref.load %arg1[%c27] : memref<49xf32, #tpu.memory_space<smem>>
    %139 = vector.broadcast %138 : f32 to vector<8x128xf32>
    %140 = arith.addf %137, %139 : vector<8x128xf32>
    %cst_12 = arith.constant 0.000000e+00 : f32
    %141 = vector.broadcast %cst_12 : f32 to vector<8x128xf32>
    %142 = arith.maximumf %140, %141 : vector<8x128xf32>
    %c43 = arith.constant 43 : index
    %143 = memref.load %arg1[%c43] : memref<49xf32, #tpu.memory_space<smem>>
    %144 = vector.broadcast %143 : f32 to vector<8x128xf32>
    %145 = arith.mulf %142, %144 : vector<8x128xf32>
    %146 = arith.addf %134, %145 : vector<8x128xf32>
    %c12 = arith.constant 12 : index
    %147 = memref.load %arg1[%c12] : memref<49xf32, #tpu.memory_space<smem>>
    %148 = vector.broadcast %147 : f32 to vector<8x128xf32>
    %149 = arith.mulf %0, %148 : vector<8x128xf32>
    %c28 = arith.constant 28 : index
    %150 = memref.load %arg1[%c28] : memref<49xf32, #tpu.memory_space<smem>>
    %151 = vector.broadcast %150 : f32 to vector<8x128xf32>
    %152 = arith.addf %149, %151 : vector<8x128xf32>
    %cst_13 = arith.constant 0.000000e+00 : f32
    %153 = vector.broadcast %cst_13 : f32 to vector<8x128xf32>
    %154 = arith.maximumf %152, %153 : vector<8x128xf32>
    %c44 = arith.constant 44 : index
    %155 = memref.load %arg1[%c44] : memref<49xf32, #tpu.memory_space<smem>>
    %156 = vector.broadcast %155 : f32 to vector<8x128xf32>
    %157 = arith.mulf %154, %156 : vector<8x128xf32>
    %158 = arith.addf %146, %157 : vector<8x128xf32>
    %c13 = arith.constant 13 : index
    %159 = memref.load %arg1[%c13] : memref<49xf32, #tpu.memory_space<smem>>
    %160 = vector.broadcast %159 : f32 to vector<8x128xf32>
    %161 = arith.mulf %0, %160 : vector<8x128xf32>
    %c29 = arith.constant 29 : index
    %162 = memref.load %arg1[%c29] : memref<49xf32, #tpu.memory_space<smem>>
    %163 = vector.broadcast %162 : f32 to vector<8x128xf32>
    %164 = arith.addf %161, %163 : vector<8x128xf32>
    %cst_14 = arith.constant 0.000000e+00 : f32
    %165 = vector.broadcast %cst_14 : f32 to vector<8x128xf32>
    %166 = arith.maximumf %164, %165 : vector<8x128xf32>
    %c45 = arith.constant 45 : index
    %167 = memref.load %arg1[%c45] : memref<49xf32, #tpu.memory_space<smem>>
    %168 = vector.broadcast %167 : f32 to vector<8x128xf32>
    %169 = arith.mulf %166, %168 : vector<8x128xf32>
    %170 = arith.addf %158, %169 : vector<8x128xf32>
    %c14 = arith.constant 14 : index
    %171 = memref.load %arg1[%c14] : memref<49xf32, #tpu.memory_space<smem>>
    %172 = vector.broadcast %171 : f32 to vector<8x128xf32>
    %173 = arith.mulf %0, %172 : vector<8x128xf32>
    %c30 = arith.constant 30 : index
    %174 = memref.load %arg1[%c30] : memref<49xf32, #tpu.memory_space<smem>>
    %175 = vector.broadcast %174 : f32 to vector<8x128xf32>
    %176 = arith.addf %173, %175 : vector<8x128xf32>
    %cst_15 = arith.constant 0.000000e+00 : f32
    %177 = vector.broadcast %cst_15 : f32 to vector<8x128xf32>
    %178 = arith.maximumf %176, %177 : vector<8x128xf32>
    %c46 = arith.constant 46 : index
    %179 = memref.load %arg1[%c46] : memref<49xf32, #tpu.memory_space<smem>>
    %180 = vector.broadcast %179 : f32 to vector<8x128xf32>
    %181 = arith.mulf %178, %180 : vector<8x128xf32>
    %182 = arith.addf %170, %181 : vector<8x128xf32>
    %c15 = arith.constant 15 : index
    %183 = memref.load %arg1[%c15] : memref<49xf32, #tpu.memory_space<smem>>
    %184 = vector.broadcast %183 : f32 to vector<8x128xf32>
    %185 = arith.mulf %0, %184 : vector<8x128xf32>
    %c31 = arith.constant 31 : index
    %186 = memref.load %arg1[%c31] : memref<49xf32, #tpu.memory_space<smem>>
    %187 = vector.broadcast %186 : f32 to vector<8x128xf32>
    %188 = arith.addf %185, %187 : vector<8x128xf32>
    %cst_16 = arith.constant 0.000000e+00 : f32
    %189 = vector.broadcast %cst_16 : f32 to vector<8x128xf32>
    %190 = arith.maximumf %188, %189 : vector<8x128xf32>
    %c47 = arith.constant 47 : index
    %191 = memref.load %arg1[%c47] : memref<49xf32, #tpu.memory_space<smem>>
    %192 = vector.broadcast %191 : f32 to vector<8x128xf32>
    %193 = arith.mulf %190, %192 : vector<8x128xf32>
    %194 = arith.addf %182, %193 : vector<8x128xf32>
    %195 = math.tanh %194 : vector<8x128xf32>
    %cst_17 = arith.constant 1.000000e+00 : f32
    %196 = vector.broadcast %cst_17 : f32 to vector<8x128xf32>
    %197 = arith.addf %196, %195 : vector<8x128xf32>
    %c0_18 = arith.constant 0 : index
    %c0_19 = arith.constant 0 : index
    %198 = vector.load %arg3[%c0_18, %c0_19] : memref<8x128xf32, #tpu.memory_space<vmem>>, vector<8x128xf32>
    tpu.vector_store %arg3[%c0_18, %c0_19], %197 {strides = array<i32>} : memref<8x128xf32, #tpu.memory_space<vmem>>, vector<8x128xf32>,
    return
  }
  func.func @transform_0(%arg0: i32) -> i32 {
    %c0_i32 = arith.constant 0 : i32
    %c0_i32_0 = arith.constant 0 : i32
    return %c0_i32 : i32
  }
  func.func @transform_1(%arg0: i32) -> (i32, i32) {
    %c0_i32 = arith.constant 0 : i32
    %c0_i32_0 = arith.constant 0 : i32
    return %arg0, %c0_i32 : i32, i32
  }
  func.func @transform_2(%arg0: i32) -> (i32, i32) {
    %c0_i32 = arith.constant 0 : i32
    %c0_i32_0 = arith.constant 0 : i32
    return %arg0, %c0_i32 : i32, i32
  }
}

</mosaic_0001>

<llo_original>
// kernel: tpu_custom_call.1
$region0: #{tpu_custom_call.1}
  #allocation0 [shape = 'u32[]', space=smem, size = 0x4, offset = 0x4, fixed_abs, tag = 'smem constant byte address 0x4 - core index']
  #allocation1 [shape = 'u32[144,128]{1,0:T(1,128)}', space=vmem, size = 0x12000, scoped, tag = 'internal scratch']
  %s0 = inlined_call_operand.hbm [shape: f32[49], index: 0, kind: input, shape index: {}]
  %s1 = inlined_call_operand.hbm [shape: f32[8,128], index: 1, kind: input, shape index: {}]
  %s2 = inlined_call_operand.hbm [shape: f32[8,128], index: 2, kind: output, shape index: {}]
  %s3 = sld [smem:[#allocation0]]
  $region26: #{tpu_custom_call.1} parent=0
    _
  %s5 = ssub.s32 1, %s3
  %s6 = scalar_select 0, %s5, %s3
  $region1: #{tpu_custom_call.1} parent=0
    #allocation2 [shape = 'u8[512]{0}', space=smem, size = 0x200, scoped, tag = 'input window, operand 0, single buffered']
    #allocation3 [shape = 's32[1]{0}', space=sflag, size = 0x4, scoped, tag = 'scoped memory for tpu_custom_call.1']
    #allocation4 [shape = 's32[1]{0}', space=sflag, size = 0x4, scoped, tag = 'scoped memory for tpu_custom_call.1']
    #allocation5 [shape = 's32[1]{0}', space=sflag, size = 0x4, scoped, tag = 'scoped memory for tpu_custom_call.1']
    #allocation6 [shape = 'u8[4096]{0}', space=vmem, size = 0x1000, scoped, tag = 'input window, operand 1, single buffered']
    #allocation7 [shape = 'u8[4096]{0}', space=vmem, size = 0x1000, scoped, tag = 'output window, operand 0, single buffered']
    %7 = vsyncpa [#allocation5], 0
    %8 = vsyncpa [#allocation3], 0
    %9 = vsyncpa [#allocation4], 0
    // Predicated region
    $region2: #{tpu_custom_call.1} parent=1 // pred_check
      _
    $region3: #{tpu_custom_call.1} parent=1 // pred_check_branch
      %11 = sbr.rel (0) target = $region5
    $region4: #{tpu_custom_call.1} parent=1 // pred_region
      %s13 = ssub.s32 16, 16
      %14 = vsyncadd [#allocation5], %s13
      %17 = dma.hbm_to_smem %s0, 16, [#allocation2], [#allocation5]
    $region5: #{tpu_custom_call.1} parent=1 // pred_fallthru
      _
    // Predicated region
    $region6: #{tpu_custom_call.1} parent=1 // pred_check
      _
    $region7: #{tpu_custom_call.1} parent=1 // pred_check_branch
      %19 = sbr.rel (0) target = $region9
    $region8: #{tpu_custom_call.1} parent=1 // pred_region
      %s21 = ssub.s32 128, 128
      %22 = vsyncadd [#allocation3], %s21
      %s24 = sshll.u32 [#allocation6], 4
      %s25 = int_to_ptr.vmem [resolvable:$true] %s24
      %27 = dma.hbm_to_vmem [thread:$0]  %s1, 128, %s25, [#allocation3]
    $region9: #{tpu_custom_call.1} parent=1 // pred_fallthru
      _
    // Predicated region
    $region10: #{tpu_custom_call.1} parent=1 // pred_check
      _
    $region11: #{tpu_custom_call.1} parent=1 // pred_check_branch
      %29 = sbr.rel (0) target = $region13
    $region12: #{tpu_custom_call.1} parent=1 // pred_region
      %30 = dma.done [#allocation5], 16
    $region13: #{tpu_custom_call.1} parent=1 // pred_fallthru
      _
    // Predicated region
    $region14: #{tpu_custom_call.1} parent=1 // pred_check
      _
    $region15: #{tpu_custom_call.1} parent=1 // pred_check_branch
      %32 = sbr.rel (0) target = $region17
    $region16: #{tpu_custom_call.1} parent=1 // pred_region
      %33 = dma.done [#allocation3], 128
    $region17: #{tpu_custom_call.1} parent=1 // pred_fallthru
      _
    %34 = sfence
    %v35 = vld [vmem:[#allocation6] sm:$0xff]
    %s36 = sld [smem:[#allocation2 + $0x30]]
    %v37 = vstv %s36
    %s38 = sld [smem:[#allocation2]]
    %v39 = vstv %s38
    %v40 = vmul.f32 %v35, %v39
    %s41 = sld [smem:[#allocation2 + $0x10]]
    %v42 = vstv %s41
    %v43 = vadd.f32 %v40, %v42
    %v44 = vmax.f32 %v43, 0.0
    %s45 = sld [smem:[#allocation2 + $0x20]]
    %v46 = vstv %s45
    %v47 = vmul.f32 %v44, %v46
    %v48 = vadd.f32 %v37, %v47
    %s49 = sld [smem:[#allocation2 + $0x1]]
    %v50 = vstv %s49
    %v51 = vmul.f32 %v35, %v50
    %s52 = sld [smem:[#allocation2 + $0x11]]
    %v53 = vstv %s52
    %v54 = vadd.f32 %v51, %v53
    %v55 = vmax.f32 %v54, 0.0
    %s56 = sld [smem:[#allocation2 + $0x21]]
    %v57 = vstv %s56
    %v58 = vmul.f32 %v55, %v57
    %v59 = vadd.f32 %v48, %v58
    %s60 = sld [smem:[#allocation2 + $0x2]]
    %v61 = vstv %s60
    %v62 = vmul.f32 %v35, %v61
    %s63 = sld [smem:[#allocation2 + $0x12]]
    %v64 = vstv %s63
    %v65 = vadd.f32 %v62, %v64
    %v66 = vmax.f32 %v65, 0.0
    %s67 = sld [smem:[#allocation2 + $0x22]]
    %v68 = vstv %s67
    %v69 = vmul.f32 %v66, %v68
    %v70 = vadd.f32 %v59, %v69
    %s71 = sld [smem:[#allocation2 + $0x3]]
    %v72 = vstv %s71
    %v73 = vmul.f32 %v35, %v72
    %s74 = sld [smem:[#allocation2 + $0x13]]
    %v75 = vstv %s74
    %v76 = vadd.f32 %v73, %v75
    %v77 = vmax.f32 %v76, 0.0
    %s78 = sld [smem:[#allocation2 + $0x23]]
    %v79 = vstv %s78
    %v80 = vmul.f32 %v77, %v79
    %v81 = vadd.f32 %v70, %v80
    %s82 = sld [smem:[#allocation2 + $0x4]]
    %v83 = vstv %s82
    %v84 = vmul.f32 %v35, %v83
    %s85 = sld [smem:[#allocation2 + $0x14]]
    %v86 = vstv %s85
    %v87 = vadd.f32 %v84, %v86
    %v88 = vmax.f32 %v87, 0.0
    %s89 = sld [smem:[#allocation2 + $0x24]]
    %v90 = vstv %s89
    %v91 = vmul.f32 %v88, %v90
    %v92 = vadd.f32 %v81, %v91
    %s93 = sld [smem:[#allocation2 + $0x5]]
    %v94 = vstv %s93
    %v95 = vmul.f32 %v35, %v94
    %s96 = sld [smem:[#allocation2 + $0x15]]
    %v97 = vstv %s96
    %v98 = vadd.f32 %v95, %v97
    %v99 = vmax.f32 %v98, 0.0
    %s100 = sld [smem:[#allocation2 + $0x25]]
    %v101 = vstv %s100
    %v102 = vmul.f32 %v99, %v101
    %v103 = vadd.f32 %v92, %v102
    %s104 = sld [smem:[#allocation2 + $0x6]]
    %v105 = vstv %s104
    %v106 = vmul.f32 %v35, %v105
    %s107 = sld [smem:[#allocation2 + $0x16]]
    %v108 = vstv %s107
    %v109 = vadd.f32 %v106, %v108
    %v110 = vmax.f32 %v109, 0.0
    %s111 = sld [smem:[#allocation2 + $0x26]]
    %v112 = vstv %s111
    %v113 = vmul.f32 %v110, %v112
    %v114 = vadd.f32 %v103, %v113
    %s115 = sld [smem:[#allocation2 + $0x7]]
    %v116 = vstv %s115
    %v117 = vmul.f32 %v35, %v116
    %s118 = sld [smem:[#allocation2 + $0x17]]
    %v119 = vstv %s118
    %v120 = vadd.f32 %v117, %v119
    %v121 = vmax.f32 %v120, 0.0
    %s122 = sld [smem:[#allocation2 + $0x27]]
    %v123 = vstv %s122
    %v124 = vmul.f32 %v121, %v123
    %v125 = vadd.f32 %v114, %v124
    %s126 = sld [smem:[#allocation2 + $0x8]]
    %v127 = vstv %s126
    %v128 = vmul.f32 %v35, %v127
    %s129 = sld [smem:[#allocation2 + $0x18]]
    %v130 = vstv %s129
    %v131 = vadd.f32 %v128, %v130
    %v132 = vmax.f32 %v131, 0.0
    %s133 = sld [smem:[#allocation2 + $0x28]]
    %v134 = vstv %s133
    %v135 = vmul.f32 %v132, %v134
    %v136 = vadd.f32 %v125, %v135
    %s137 = sld [smem:[#allocation2 + $0x9]]
    %v138 = vstv %s137
    %v139 = vmul.f32 %v35, %v138
    %s140 = sld [smem:[#allocation2 + $0x19]]
    %v141 = vstv %s140
    %v142 = vadd.f32 %v139, %v141
    %v143 = vmax.f32 %v142, 0.0
    %s144 = sld [smem:[#allocation2 + $0x29]]
    %v145 = vstv %s144
    %v146 = vmul.f32 %v143, %v145
    %v147 = vadd.f32 %v136, %v146
    %s148 = sld [smem:[#allocation2 + $0xa]]
    %v149 = vstv %s148
    %v150 = vmul.f32 %v35, %v149
    %s151 = sld [smem:[#allocation2 + $0x1a]]
    %v152 = vstv %s151
    %v153 = vadd.f32 %v150, %v152
    %v154 = vmax.f32 %v153, 0.0
    %s155 = sld [smem:[#allocation2 + $0x2a]]
    %v156 = vstv %s155
    %v157 = vmul.f32 %v154, %v156
    %v158 = vadd.f32 %v147, %v157
    %s159 = sld [smem:[#allocation2 + $0xb]]
    %v160 = vstv %s159
    %v161 = vmul.f32 %v35, %v160
    %s162 = sld [smem:[#allocation2 + $0x1b]]
    %v163 = vstv %s162
    %v164 = vadd.f32 %v161, %v163
    %v165 = vmax.f32 %v164, 0.0
    %s166 = sld [smem:[#allocation2 + $0x2b]]
    %v167 = vstv %s166
    %v168 = vmul.f32 %v165, %v167
    %v169 = vadd.f32 %v158, %v168
    %s170 = sld [smem:[#allocation2 + $0xc]]
    %v171 = vstv %s170
    %v172 = vmul.f32 %v35, %v171
    %s173 = sld [smem:[#allocation2 + $0x1c]]
    %v174 = vstv %s173
    %v175 = vadd.f32 %v172, %v174
    %v176 = vmax.f32 %v175, 0.0
    %s177 = sld [smem:[#allocation2 + $0x2c]]
    %v178 = vstv %s177
    %v179 = vmul.f32 %v176, %v178
    %v180 = vadd.f32 %v169, %v179
    %s181 = sld [smem:[#allocation2 + $0xd]]
    %v182 = vstv %s181
    %v183 = vmul.f32 %v35, %v182
    %s184 = sld [smem:[#allocation2 + $0x1d]]
    %v185 = vstv %s184
    %v186 = vadd.f32 %v183, %v185
    %v187 = vmax.f32 %v186, 0.0
    %s188 = sld [smem:[#allocation2 + $0x2d]]
    %v189 = vstv %s188
    %v190 = vmul.f32 %v187, %v189
    %v191 = vadd.f32 %v180, %v190
    %s192 = sld [smem:[#allocation2 + $0xe]]
    %v193 = vstv %s192
    %v194 = vmul.f32 %v35, %v193
    %s195 = sld [smem:[#allocation2 + $0x1e]]
    %v196 = vstv %s195
    %v197 = vadd.f32 %v194, %v196
    %v198 = vmax.f32 %v197, 0.0
    %s199 = sld [smem:[#allocation2 + $0x2e]]
    %v200 = vstv %s199
    %v201 = vmul.f32 %v198, %v200
    %v202 = vadd.f32 %v191, %v201
    %s203 = sld [smem:[#allocation2 + $0xf]]
    %v204 = vstv %s203
    %v205 = vmul.f32 %v35, %v204
    %s206 = sld [smem:[#allocation2 + $0x1f]]
    %v207 = vstv %s206
    %v208 = vadd.f32 %v205, %v207
    %v209 = vmax.f32 %v208, 0.0
    %s210 = sld [smem:[#allocation2 + $0x2f]]
    %v211 = vstv %s210
    %v212 = vmul.f32 %v209, %v211
    %v213 = vadd.f32 %v202, %v212
    %v214 = vtanh.pop %v213
    %v215 = vadd.f32 %v214, 1.0
    %216 = vst [vmem:[#allocation7] sm:$0xff] %v215
    // Predicated region
    $region18: #{tpu_custom_call.1} parent=1 // pred_check
      _
    $region19: #{tpu_custom_call.1} parent=1 // pred_check_branch
      %218 = sbr.rel (0) target = $region21
    $region20: #{tpu_custom_call.1} parent=1 // pred_region
      %s220 = ssub.s32 128, 128
      %221 = vsyncadd [#allocation4], %s220
      %s223 = sshll.u32 [#allocation7], 4
      %s224 = int_to_ptr.vmem [resolvable:$true] %s223
      %226 = dma.vmem_to_hbm [thread:$0]  %s224, 128, %s2, [#allocation4]
    $region21: #{tpu_custom_call.1} parent=1 // pred_fallthru
      _
    // Predicated region
    $region22: #{tpu_custom_call.1} parent=1 // pred_check
      _
    $region23: #{tpu_custom_call.1} parent=1 // pred_check_branch
      %228 = sbr.rel (0) target = $region25
    $region24: #{tpu_custom_call.1} parent=1 // pred_region
      %229 = dma.done [#allocation4], 128
    $region25: #{tpu_custom_call.1} parent=1 // pred_fallthru
      _
    %230 = vsyncpa [#allocation3], 1
    %231 = vsyncpa [#allocation4], 1
    %232 = vsyncpa [#allocation5], 1

</llo_original>
